<compile_context>
chip_gen: v6e
topology: v6e:2x2x1
jax: 0.10.0
libtpu: 0.0.40
codegen_flags: <defaults>
</compile_context>

<pallas_src>
import functools
import math

import jax
import jax.numpy as jnp
from jax import lax
from jax.experimental import pallas as pl
from jax.experimental.pallas import tpu as pltpu


def _round_up(x: int, m: int) -> int:
    return (x + m - 1) // m * m


def _layer_norm_f32(v, gamma, beta, eps):
    mu = jnp.mean(v, axis=-1, keepdims=True)
    c = v - mu
    var = jnp.mean(c * c, axis=-1, keepdims=True)
    return c * lax.rsqrt(var + eps) * gamma + beta


def _device_config():
    """Per-generation tile caps / VMEM budget (conservative fallback otherwise)."""
    kind = ""
    try:
        kind = jax.devices()[0].device_kind.lower()
    except Exception:
        pass
    if "v7" in kind:       # 2 TensorCores, 64 MiB VMEM per TC
        return dict(tm_cap=512, tf_cap=2048, budget=44 << 20,
                    vmem_limit=48 << 20, cores=2)
    if "v6" in kind:       # 1 TC, 128 MiB VMEM, ~680 FLOP/byte roofline
        return dict(tm_cap=1024, tf_cap=4096, budget=90 << 20,
                    vmem_limit=100 << 20, cores=1)
    if "v5e" in kind or "v5 lite" in kind or "v5litepod" in kind:
        return dict(tm_cap=256, tf_cap=1024, budget=40 << 20,
                    vmem_limit=48 << 20, cores=1)
    return dict(tm_cap=512, tf_cap=2048, budget=28 << 20,
                vmem_limit=32 << 20, cores=1)


# ---------------------------------------------------------------------------
# Kernels
# ---------------------------------------------------------------------------

def _ffn_kernel_single(x_ref, w1_ref, b1_ref, w2_ref, b2_ref, g_ref, bt_ref,
                       o_ref, *, alpha, eps, pre_ln):
    """Whole ff_size in one step: no accumulator, no pl.when phases."""
    x_f32 = x_ref[...].astype(jnp.float32)
    if pre_ln:
        xn = _layer_norm_f32(x_f32, g_ref[...].astype(jnp.float32),
                             bt_ref[...].astype(jnp.float32), eps)
        xin = xn.astype(x_ref.dtype)      # single cast; dot in native dtype
    else:
        xin = x_ref[...]                  # feed x straight to the MXU

    h = jnp.dot(xin, w1_ref[...], preferred_element_type=jnp.float32)
    h = jnp.maximum(h + b1_ref[...].astype(jnp.float32), 0.0)
    y = jnp.dot(h.astype(w2_ref.dtype), w2_ref[...],
                preferred_element_type=jnp.float32)
    y = y + b2_ref[...].astype(jnp.float32) + alpha * x_f32   # bias + residual
    if not pre_ln:
        y = _layer_norm_f32(y, g_ref[...].astype(jnp.float32),
                            bt_ref[...].astype(jnp.float32), eps)
    o_ref[...] = y.astype(o_ref.dtype)


def _ffn_kernel_multi(x_ref, w1_ref, b1_ref, w2_ref, b2_ref, g_ref, bt_ref,
                      o_ref, *scratch, alpha, eps, pre_ln):
    """ff_size split across grid axis 1; f32 accumulator resident in VMEM."""
    f = pl.program_id(1)
    if pre_ln:
        xin_ref, acc_ref = scratch
    else:
        (acc_ref,) = scratch

    @pl.when(f == 0)
    def _init():
        # Fold bias2 + residual into the accumulator init (saves a finalize pass).
        acc_ref[...] = (b2_ref[...].astype(jnp.float32)
                        + alpha * x_ref[...].astype(jnp.float32))
        if pre_ln:
            xn = _layer_norm_f32(x_ref[...].astype(jnp.float32),
                                 g_ref[...].astype(jnp.float32),
                                 bt_ref[...].astype(jnp.float32), eps)
            xin_ref[...] = xn.astype(xin_ref.dtype)

    xin = xin_ref[...] if pre_ln else x_ref[...]
    h = jnp.dot(xin, w1_ref[...], preferred_element_type=jnp.float32)
    h = jnp.maximum(h + b1_ref[...].astype(jnp.float32), 0.0)
    acc_ref[...] += jnp.dot(h.astype(w2_ref.dtype), w2_ref[...],
                            preferred_element_type=jnp.float32)

    @pl.when(f == pl.num_programs(1) - 1)
    def _finalize():
        y = acc_ref[...]
        if not pre_ln:
            y = _layer_norm_f32(y, g_ref[...].astype(jnp.float32),
                                bt_ref[...].astype(jnp.float32), eps)
        o_ref[...] = y.astype(o_ref.dtype)


# ---------------------------------------------------------------------------
# Wrapper
# ---------------------------------------------------------------------------

def positionwise_feed_forward(x, w1, b1, w2, b2, gamma, beta, *,
                              alpha: float = 1.0, layer_norm: str = "post",
                              eps: float = 1e-6, tm: int | None = None,
                              tf: int | None = None):
    """x: (..., D); w1: (D, F); b1: (F,); w2: (F, D); b2/gamma/beta: (D,)."""
    assert layer_norm in ("pre", "post")
    pre_ln = layer_norm == "pre"
    orig_shape = x.shape
    D = orig_shape[-1]
    F = w1.shape[1]
    assert w1.shape == (D, F) and w2.shape == (F, D)
    assert b1.shape == (F,) and b2.shape == (D,)

    x2 = x.reshape(-1, D)
    M = x2.shape[0]
    x_isz = x.dtype.itemsize
    w_isz = w1.dtype.itemsize

    cfg = _device_config()

    # --- ff tile: full F if it fits, else the largest 128-multiple dividing F.
    if tf is None:
        if F <= cfg["tf_cap"]:
            tf = F
        else:
            tf = 0
            t = (cfg["tf_cap"] // 128) * 128
            while t >= 128:
                if F % t == 0:
                    tf = t
                    break
                t -= 128
            if tf == 0:
                tf = min((cfg["tf_cap"] // 128) * 128, _round_up(F, 128))

    # --- row tile: large (amortize weight streaming), but >=2 tiles on v7x.
    if tm is None:
        tm = min(_round_up(M, 8), cfg["tm_cap"])
        if cfg["cores"] >= 2 and M > 8:
            tm = min(tm, _round_up(pl.cdiv(M, cfg["cores"]), 8))

    def _footprint(tm_, tf_):
        mf = (_round_up(F, tf_) // tf_) > 1
        n = 2 * tm_ * D * x_isz              # x tile (double-buffered)
        n += 2 * D * tf_ * w_isz             # W1 slab
        n += 2 * tf_ * w_isz                 # b1 slab
        n += 2 * tf_ * D * w_isz             # W2 slab
        n += 2 * 3 * D * w_isz               # b2, gamma, beta
        n += 2 * tm_ * D * x_isz             # out tile
        n += tm_ * tf_ * 4                   # activation h (f32)
        if mf:
            n += tm_ * D * 4                 # accumulator
            if pre_ln:
                n += tm_ * D * x_isz         # cached normalized x
        return n

    while _footprint(tm, tf) > cfg["budget"]:
        if tf >= 1024 and (tf // 2) % 128 == 0:
            tf //= 2
        elif tm > 128:
            tm = max(128, _round_up(tm // 2, 8))
        else:
            break

    # --- pad rows / ff to tile multiples (exact: relu(0+0)=0 and zero W2 rows).
    M_pad = _round_up(M, tm)
    if M_pad != M:
        x2 = jnp.pad(x2, ((0, M_pad - M), (0, 0)))
    F_pad = _round_up(F, tf)
    if F_pad != F:
        # TODO(synk): if your real F is not a multiple of tf, pre-pad weights once
        # outside the hot path instead of per call.
        w1 = jnp.pad(w1, ((0, 0), (0, F_pad - F)))
        b1 = jnp.pad(b1, ((0, F_pad - F),))
        w2 = jnp.pad(w2, ((0, F_pad - F), (0, 0)))

    multi_f = (F_pad // tf) > 1

    b1_2 = b1.reshape(1, F_pad)
    b2_2 = b2.reshape(1, D)
    g_2 = gamma.reshape(1, D)
    bt_2 = beta.reshape(1, D)

    if not multi_f:
        grid = (M_pad // tm,)
        kernel = functools.partial(_ffn_kernel_single, alpha=float(alpha),
                                   eps=float(eps), pre_ln=pre_ln)
        in_specs = [
            pl.BlockSpec((tm, D), lambda m: (m, 0)),       # x rows
            pl.BlockSpec((D, F_pad), lambda m: (0, 0)),    # W1
            pl.BlockSpec((1, F_pad), lambda m: (0, 0)),    # b1
            pl.BlockSpec((F_pad, D), lambda m: (0, 0)),    # W2
            pl.BlockSpec((1, D), lambda m: (0, 0)),        # b2
            pl.BlockSpec((1, D), lambda m: (0, 0)),        # gamma
            pl.BlockSpec((1, D), lambda m: (0, 0)),        # beta
        ]
        out_specs = pl.BlockSpec((tm, D), lambda m: (m, 0))
        scratch_shapes = []
        dim_sem = ("parallel",)
    else:
        grid = (M_pad // tm, F_pad // tf)
        kernel = functools.partial(_ffn_kernel_multi, alpha=float(alpha),
                                   eps=float(eps), pre_ln=pre_ln)
        in_specs = [
            pl.BlockSpec((tm, D), lambda m, f: (m, 0)),    # x rows (resident over f)
            pl.BlockSpec((D, tf), lambda m, f: (0, f)),    # W1 slab
            pl.BlockSpec((1, tf), lambda m, f: (0, f)),    # b1 slab
            pl.BlockSpec((tf, D), lambda m, f: (f, 0)),    # W2 slab
            pl.BlockSpec((1, D), lambda m, f: (0, 0)),     # b2
            pl.BlockSpec((1, D), lambda m, f: (0, 0)),     # gamma
            pl.BlockSpec((1, D), lambda m, f: (0, 0)),     # beta
        ]
        out_specs = pl.BlockSpec((tm, D), lambda m, f: (m, 0))
        scratch_shapes = []
        if pre_ln:
            scratch_shapes.append(pltpu.VMEM((tm, D), x.dtype))   # normalized x
        scratch_shapes.append(pltpu.VMEM((tm, D), jnp.float32))   # accumulator
        dim_sem = ("parallel", "arbitrary")

    out = pl.pallas_call(
        kernel,
        out_shape=jax.ShapeDtypeStruct((M_pad, D), x.dtype),
        grid_spec=pltpu.PrefetchScalarGridSpec(
            num_scalar_prefetch=0,
            grid=grid,
            in_specs=in_specs,
            out_specs=out_specs,
            scratch_shapes=scratch_shapes,
        ),
        compiler_params=pltpu.CompilerParams(
            dimension_semantics=dim_sem,
            vmem_limit_bytes=cfg["vmem_limit"],
        ),
    )(x2, w1, b1_2, w2, b2_2, g_2, bt_2)

    return out[:M].reshape(orig_shape)


# ---------------------------------------------------------------------------
# Self-test
# ---------------------------------------------------------------------------

if __name__ == "__main__":
    def _ln_ref(v, g, b, eps=1e-6):
        mu = jnp.mean(v, axis=-1, keepdims=True)
        var = jnp.mean((v - mu) ** 2, axis=-1, keepdims=True)
        return (v - mu) / jnp.sqrt(var + eps) * g + b

    def _ffn_ref(x, w1, b1, w2, b2, g, bt, alpha, layer_norm):
        xin = _ln_ref(x, g, bt) if layer_norm == "pre" else x
        y = jnp.maximum(xin @ w1 + b1, 0.0) @ w2 + b2 + alpha * x
        return _ln_ref(y, g, bt) if layer_norm == "post" else y

    def _make(key, B, L, D, F):
        kx, k1, k2, k3, k4, k5, k6 = jax.random.split(key, 7)
        x = jax.random.normal(kx, (B, L, D), dtype=jnp.float32)
        w1 = jax.random.normal(k1, (D, F), dtype=jnp.float32) / math.sqrt(D)
        b1 = 0.1 * jax.random.normal(k2, (F,), dtype=jnp.float32)
        w2 = jax.random.normal(k3, (F, D), dtype=jnp.float32) / math.sqrt(F)
        b2 = 0.1 * jax.random.normal(k4, (D,), dtype=jnp.float32)
        g = 1.0 + 0.1 * jax.random.normal(k5, (D,), dtype=jnp.float32)
        bt = 0.1 * jax.random.normal(k6, (D,), dtype=jnp.float32)
        return x, w1, b1, w2, b2, g, bt

    key = jax.random.PRNGKey(0)
    k_a, k_b = jax.random.split(key)

    # 1) Module-like small shapes (single ff-step path): B=2, L=8, D=32, F=64.
    args = _make(k_a, 2, 8, 32, 64)
    for ln in ("post", "pre"):
        out = jax.block_until_ready(
            positionwise_feed_forward(*args, alpha=1.0, layer_norm=ln))
        ref = _ffn_ref(*args, 1.0, ln)
        assert out.shape == args[0].shape
        err = float(jnp.max(jnp.abs(out - ref)))
        assert jnp.allclose(out, ref, atol=5e-5, rtol=5e-5), (ln, err)

    # 2) Force the multi ff-step (accumulator) path with a small forced tf.
    args = _make(k_b, 2, 8, 128, 256)
    for ln in ("post", "pre"):
        out = jax.block_until_ready(
            positionwise_feed_forward(*args, alpha=0.5, layer_norm=ln, tf=128))
        ref = _ffn_ref(*args, 0.5, ln)
        err = float(jnp.max(jnp.abs(out - ref)))
        assert jnp.allclose(out, ref, atol=5e-5, rtol=5e-5), (ln, err)

    print("KERNEL_OK")
</pallas_src>

<mosaic_0001>
module attributes {stable_mosaic.version = 11 : i64} {
  func.func @_ffn_kernel_single(%arg0: i32, %arg1: memref<16x32xf32, #tpu.memory_space<vmem>>, %arg2: memref<32x64xf32, #tpu.memory_space<vmem>>, %arg3: memref<1x64xf32, #tpu.memory_space<vmem>>, %arg4: memref<64x32xf32, #tpu.memory_space<vmem>>, %arg5: memref<1x32xf32, #tpu.memory_space<vmem>>, %arg6: memref<1x32xf32, #tpu.memory_space<vmem>>, %arg7: memref<1x32xf32, #tpu.memory_space<vmem>>, %arg8: memref<16x32xf32, #tpu.memory_space<vmem>>) attributes {dimension_semantics = [#tpu.dimension_semantics<parallel>], iteration_bounds = array<i64: 1>, scalar_prefetch = 0 : i64, scratch_operands = 0 : i64, tpu.core_type = #tpu.core_type<tc>, window_params = [{transform_indices = @transform_0, window_bounds = array<i64: 16, 32>}, {pipeline_mode = #tpu.pipeline_mode<synchronous>, transform_indices = @transform_1, window_bounds = array<i64: 32, 64>}, {pipeline_mode = #tpu.pipeline_mode<synchronous>, transform_indices = @transform_2, window_bounds = array<i64: 1, 64>}, {pipeline_mode = #tpu.pipeline_mode<synchronous>, transform_indices = @transform_3, window_bounds = array<i64: 64, 32>}, {pipeline_mode = #tpu.pipeline_mode<synchronous>, transform_indices = @transform_4, window_bounds = array<i64: 1, 32>}, {pipeline_mode = #tpu.pipeline_mode<synchronous>, transform_indices = @transform_5, window_bounds = array<i64: 1, 32>}, {pipeline_mode = #tpu.pipeline_mode<synchronous>, transform_indices = @transform_6, window_bounds = array<i64: 1, 32>}, {transform_indices = @transform_7, window_bounds = array<i64: 16, 32>}]} {
    %c0 = arith.constant 0 : index
    %c0_0 = arith.constant 0 : index
    %0 = vector.load %arg1[%c0, %c0_0] : memref<16x32xf32, #tpu.memory_space<vmem>>, vector<16x32xf32>
    %c0_1 = arith.constant 0 : index
    %c0_2 = arith.constant 0 : index
    %1 = vector.load %arg1[%c0_1, %c0_2] : memref<16x32xf32, #tpu.memory_space<vmem>>, vector<16x32xf32>
    %c0_3 = arith.constant 0 : index
    %c0_4 = arith.constant 0 : index
    %2 = vector.load %arg2[%c0_3, %c0_4] : memref<32x64xf32, #tpu.memory_space<vmem>>, vector<32x64xf32>
    %cst = arith.constant dense<0.000000e+00> : vector<16x64xf32>
    %3 = tpu.matmul %1, %2, %cst {dimension_numbers = #tpu.dot_dimension_numbers<[1], [0], [0], [1], [0, 0, 1, 1], [], []>} : vector<16x32xf32>, vector<32x64xf32>, vector<16x64xf32> -> vector<16x64xf32>
    %c0_5 = arith.constant 0 : index
    %c0_6 = arith.constant 0 : index
    %4 = vector.load %arg3[%c0_5, %c0_6] : memref<1x64xf32, #tpu.memory_space<vmem>>, vector<1x64xf32>
    %5 = vector.broadcast %4 : vector<1x64xf32> to vector<16x64xf32>
    %6 = arith.addf %3, %5 : vector<16x64xf32>
    %cst_7 = arith.constant 0.000000e+00 : f32
    %7 = vector.broadcast %cst_7 : f32 to vector<16x64xf32>
    %8 = arith.maximumf %6, %7 : vector<16x64xf32>
    %c0_8 = arith.constant 0 : index
    %c0_9 = arith.constant 0 : index
    %9 = vector.load %arg4[%c0_8, %c0_9] : memref<64x32xf32, #tpu.memory_space<vmem>>, vector<64x32xf32>
    %cst_10 = arith.constant dense<0.000000e+00> : vector<16x32xf32>
    %10 = tpu.matmul %8, %9, %cst_10 {dimension_numbers = #tpu.dot_dimension_numbers<[1], [0], [0], [1], [0, 0, 1, 1], [], []>} : vector<16x64xf32>, vector<64x32xf32>, vector<16x32xf32> -> vector<16x32xf32>
    %c0_11 = arith.constant 0 : index
    %c0_12 = arith.constant 0 : index
    %11 = vector.load %arg5[%c0_11, %c0_12] : memref<1x32xf32, #tpu.memory_space<vmem>>, vector<1x32xf32>
    %12 = vector.broadcast %11 : vector<1x32xf32> to vector<16x32xf32>
    %13 = arith.addf %10, %12 : vector<16x32xf32>
    %cst_13 = arith.constant 1.000000e+00 : f32
    %14 = vector.broadcast %cst_13 : f32 to vector<16x32xf32>
    %15 = arith.mulf %14, %0 : vector<16x32xf32>
    %16 = arith.addf %13, %15 : vector<16x32xf32>
    %c0_14 = arith.constant 0 : index
    %c0_15 = arith.constant 0 : index
    %17 = vector.load %arg6[%c0_14, %c0_15] : memref<1x32xf32, #tpu.memory_space<vmem>>, vector<1x32xf32>
    %c0_16 = arith.constant 0 : index
    %c0_17 = arith.constant 0 : index
    %18 = vector.load %arg7[%c0_16, %c0_17] : memref<1x32xf32, #tpu.memory_space<vmem>>, vector<1x32xf32>
    %cst_18 = arith.constant dense<0.000000e+00> : vector<16xf32>
    %19 = vector.multi_reduction <add>, %16, %cst_18 [1] : vector<16x32xf32> to vector<16xf32>
    %20 = vector.shape_cast %19 : vector<16xf32> to vector<16x1xf32>
    %cst_19 = arith.constant 3.200000e+01 : f32
    %21 = vector.broadcast %cst_19 : f32 to vector<16x1xf32>
    %22 = arith.divf %20, %21 : vector<16x1xf32>
    %23 = vector.broadcast %22 : vector<16x1xf32> to vector<16x32xf32>
    %24 = arith.subf %16, %23 : vector<16x32xf32>
    %25 = arith.mulf %24, %24 : vector<16x32xf32>
    %cst_20 = arith.constant dense<0.000000e+00> : vector<16xf32>
    %26 = vector.multi_reduction <add>, %25, %cst_20 [1] : vector<16x32xf32> to vector<16xf32>
    %27 = vector.shape_cast %26 : vector<16xf32> to vector<16x1xf32>
    %cst_21 = arith.constant 3.200000e+01 : f32
    %28 = vector.broadcast %cst_21 : f32 to vector<16x1xf32>
    %29 = arith.divf %27, %28 : vector<16x1xf32>
    %cst_22 = arith.constant 9.99999997E-7 : f32
    %30 = vector.broadcast %cst_22 : f32 to vector<16x1xf32>
    %31 = arith.addf %29, %30 : vector<16x1xf32>
    %32 = math.rsqrt %31 : vector<16x1xf32>
    %33 = vector.broadcast %32 : vector<16x1xf32> to vector<16x32xf32>
    %34 = arith.mulf %24, %33 : vector<16x32xf32>
    %35 = vector.broadcast %17 : vector<1x32xf32> to vector<16x32xf32>
    %36 = arith.mulf %34, %35 : vector<16x32xf32>
    %37 = vector.broadcast %18 : vector<1x32xf32> to vector<16x32xf32>
    %38 = arith.addf %36, %37 : vector<16x32xf32>
    %c0_23 = arith.constant 0 : index
    %c0_24 = arith.constant 0 : index
    %39 = vector.load %arg8[%c0_23, %c0_24] : memref<16x32xf32, #tpu.memory_space<vmem>>, vector<16x32xf32>
    tpu.vector_store %arg8[%c0_23, %c0_24], %38 {strides = array<i32>} : memref<16x32xf32, #tpu.memory_space<vmem>>, vector<16x32xf32>,
    return
  }
  func.func @transform_0(%arg0: i32) -> (i32, i32) {
    %c0_i32 = arith.constant 0 : i32
    %c0_i32_0 = arith.constant 0 : i32
    return %arg0, %c0_i32 : i32, i32
  }
  func.func @transform_1(%arg0: i32) -> (i32, i32) {
    %c0_i32 = arith.constant 0 : i32
    %c0_i32_0 = arith.constant 0 : i32
    %c0_i32_1 = arith.constant 0 : i32
    return %c0_i32, %c0_i32_0 : i32, i32
  }
  func.func @transform_2(%arg0: i32) -> (i32, i32) {
    %c0_i32 = arith.constant 0 : i32
    %c0_i32_0 = arith.constant 0 : i32
    %c0_i32_1 = arith.constant 0 : i32
    return %c0_i32, %c0_i32_0 : i32, i32
  }
  func.func @transform_3(%arg0: i32) -> (i32, i32) {
    %c0_i32 = arith.constant 0 : i32
    %c0_i32_0 = arith.constant 0 : i32
    %c0_i32_1 = arith.constant 0 : i32
    return %c0_i32, %c0_i32_0 : i32, i32
  }
  func.func @transform_4(%arg0: i32) -> (i32, i32) {
    %c0_i32 = arith.constant 0 : i32
    %c0_i32_0 = arith.constant 0 : i32
    %c0_i32_1 = arith.constant 0 : i32
    return %c0_i32, %c0_i32_0 : i32, i32
  }
  func.func @transform_5(%arg0: i32) -> (i32, i32) {
    %c0_i32 = arith.constant 0 : i32
    %c0_i32_0 = arith.constant 0 : i32
    %c0_i32_1 = arith.constant 0 : i32
    return %c0_i32, %c0_i32_0 : i32, i32
  }
  func.func @transform_6(%arg0: i32) -> (i32, i32) {
    %c0_i32 = arith.constant 0 : i32
    %c0_i32_0 = arith.constant 0 : i32
    %c0_i32_1 = arith.constant 0 : i32
    return %c0_i32, %c0_i32_0 : i32, i32
  }
  func.func @transform_7(%arg0: i32) -> (i32, i32) {
    %c0_i32 = arith.constant 0 : i32
    %c0_i32_0 = arith.constant 0 : i32
    return %arg0, %c0_i32 : i32, i32
  }
}

</mosaic_0001>

<llo_original>
// kernel: tpu_custom_call.1
$region0: #{tpu_custom_call.1}
  #allocation0 [shape = 'u32[]', space=smem, size = 0x4, offset = 0x4, fixed_abs, tag = 'smem constant byte address 0x4 - core index']
  #allocation1 [shape = 'u32[144,128]{1,0:T(1,128)}', space=vmem, size = 0x12000, scoped, tag = 'internal scratch']
  %s0 = inlined_call_operand.vmem [shape: f32[16,32], index: 0, kind: input, shape index: {}]
  %s1 = inlined_call_operand.vmem [shape: f32[32,64], index: 1, kind: input, shape index: {}]
  %s2 = inlined_call_operand.vmem [shape: f32[1,64], index: 2, kind: input, shape index: {}]
  %s3 = inlined_call_operand.vmem [shape: f32[64,32], index: 3, kind: input, shape index: {}]
  %s4 = inlined_call_operand.vmem [shape: f32[1,32], index: 4, kind: input, shape index: {}]
  %s5 = inlined_call_operand.vmem [shape: f32[1,32], index: 5, kind: input, shape index: {}]
  %s6 = inlined_call_operand.vmem [shape: f32[1,32], index: 6, kind: input, shape index: {}]
  %s7 = inlined_call_operand.hbm [shape: f32[16,32], index: 7, kind: output, shape index: {}]
  %s8 = sld [smem:[#allocation0]]
  $region38: #{tpu_custom_call.1} parent=0
    _
  %s10 = ssub.s32 1, %s8
  %s11 = scalar_select 0, %s10, %s8
  $region1: #{tpu_custom_call.1} parent=0
    #allocation2 [shape = 'u8[8192]{0}', space=vmem, size = 0x2000, scoped, tag = 'output window, operand 0, single buffered']
    #allocation3 [shape = 's32[1]{0}', space=sflag, size = 0x4, scoped, tag = 'scoped memory for tpu_custom_call.1']
    %12 = vsyncpa [#allocation3], 0
    // Predicated region
    $region2: #{tpu_custom_call.1} parent=1 // pred_check
      _
    $region3: #{tpu_custom_call.1} parent=1 // pred_check_branch
      %14 = sbr.rel (0) target = $region5
    $region4: #{tpu_custom_call.1} parent=1 // pred_region
      _
    $region5: #{tpu_custom_call.1} parent=1 // pred_fallthru
      _
    // Predicated region
    $region6: #{tpu_custom_call.1} parent=1 // pred_check
      _
    $region7: #{tpu_custom_call.1} parent=1 // pred_check_branch
      %16 = sbr.rel (0) target = $region9
    $region8: #{tpu_custom_call.1} parent=1 // pred_region
      _
    $region9: #{tpu_custom_call.1} parent=1 // pred_fallthru
      _
    // Predicated region
    $region10: #{tpu_custom_call.1} parent=1 // pred_check
      _
    $region11: #{tpu_custom_call.1} parent=1 // pred_check_branch
      %18 = sbr.rel (0) target = $region13
    $region12: #{tpu_custom_call.1} parent=1 // pred_region
      _
    $region13: #{tpu_custom_call.1} parent=1 // pred_fallthru
      _
    // Predicated region
    $region14: #{tpu_custom_call.1} parent=1 // pred_check
      _
    $region15: #{tpu_custom_call.1} parent=1 // pred_check_branch
      %20 = sbr.rel (0) target = $region17
    $region16: #{tpu_custom_call.1} parent=1 // pred_region
      _
    $region17: #{tpu_custom_call.1} parent=1 // pred_fallthru
      _
    // Predicated region
    $region18: #{tpu_custom_call.1} parent=1 // pred_check
      _
    $region19: #{tpu_custom_call.1} parent=1 // pred_check_branch
      %22 = sbr.rel (0) target = $region21
    $region20: #{tpu_custom_call.1} parent=1 // pred_region
      _
    $region21: #{tpu_custom_call.1} parent=1 // pred_fallthru
      _
    // Predicated region
    $region22: #{tpu_custom_call.1} parent=1 // pred_check
      _
    $region23: #{tpu_custom_call.1} parent=1 // pred_check_branch
      %24 = sbr.rel (0) target = $region25
    $region24: #{tpu_custom_call.1} parent=1 // pred_region
      _
    $region25: #{tpu_custom_call.1} parent=1 // pred_fallthru
      _
    // Predicated region
    $region26: #{tpu_custom_call.1} parent=1 // pred_check
      _
    $region27: #{tpu_custom_call.1} parent=1 // pred_check_branch
      %26 = sbr.rel (0) target = $region29
    $region28: #{tpu_custom_call.1} parent=1 // pred_region
      _
    $region29: #{tpu_custom_call.1} parent=1 // pred_fallthru
      _
    %v27 = vld [vmem:[%s0] sm:$0xff]
    %v28 = vld [vmem:[%s0 + $0x8] sm:$0xff]
    %v29 = vld [vmem:[%s1] sm:$0xff]
    %v30 = vld [vmem:[%s1 + $0x8] sm:$0xff]
    %v31 = vld [vmem:[%s1 + $0x10] sm:$0xff]
    %v32 = vld [vmem:[%s1 + $0x18] sm:$0xff]
    %v33 = vld [vmem:[%s2] sm:$0x1]
    %v35 = vlaneseq
    %v36 = vshrl.u32 %v35, 7
    %v37 = vsub.s32 0, %v36
    %v38 = vrot.slane %v33, %v37
    %vm40 = vcmask 261120
    %v42 = vsel %vm40, %v27, 0
    %v45 = vsel %vm40, %v28, 0
    %47 = vmatprep.subr.mxu0 0.0
    %48 = vmatpush1.msra.mxu0 0.0
    %49 = vmatprep.subr.mxu0 0.0
    %50 = vmatpush1.msra.mxu0 0.0
    %51 = vmatprep.subr.mxu0 0.0
    %52 = vmatpush1.msra.mxu0 0.0
    %53 = vmatprep.subr.mxu0 0.0
    %54 = vmatpush1.msra.mxu0 0.0
    %55 = vmatprep.subr.mxu0 0.0
    %56 = vmatpush1.msra.mxu0 0.0
    %57 = vmatprep.subr.mxu0 0.0
    %58 = vmatpush1.msra.mxu0 0.0
    %59 = vmatprep.subr.mxu0 0.0
    %60 = vmatpush1.msra.mxu0 0.0
    %61 = vmatprep.subr.mxu0 0.0
    %62 = vmatpush1.msra.mxu0 0.0
    %63 = vmatprep.subr.mxu0 0.0
    %64 = vmatpush1.msra.mxu0 0.0
    %65 = vmatprep.subr.mxu0 0.0
    %66 = vmatpush1.msra.mxu0 0.0
    %67 = vmatprep.subr.mxu0 0.0
    %68 = vmatpush1.msra.mxu0 0.0
    %69 = vmatprep.subr.mxu0 0.0
    %70 = vmatpush1.msra.mxu0 0.0
    %71 = vmatprep.subr.mxu0 0.0
    %72 = vmatpush1.msra.mxu0 %v32
    %73 = vmatprep.subr.mxu0 0.0
    %74 = vmatpush1.msra.mxu0 %v31
    %75 = vmatprep.subr.mxu0 0.0
    %76 = vmatpush1.msra.mxu0 %v30
    %77 = vmatprep.subr.mxu0 0.0
    %78 = vmatpush1.msra.mxu0 %v29
    %79 = vmatprep.subr.mxu0 0.0
    %80 = vmatpush2.msra.mxu0 0.0
    %81 = vmatprep.subr.mxu0 0.0
    %82 = vmatpush2.msra.mxu0 0.0
    %83 = vmatprep.subr.mxu0 0.0
    %84 = vmatpush2.msra.mxu0 0.0
    %85 = vmatprep.subr.mxu0 0.0
    %86 = vmatpush2.msra.mxu0 0.0
    %87 = vmatprep.subr.mxu0 0.0
    %88 = vmatpush2.msra.mxu0 0.0
    %89 = vmatprep.subr.mxu0 0.0
    %90 = vmatpush2.msra.mxu0 0.0
    %91 = vmatprep.subr.mxu0 0.0
    %92 = vmatpush2.msra.mxu0 0.0
    %93 = vmatprep.subr.mxu0 0.0
    %94 = vmatpush2.msra.mxu0 0.0
    %95 = vmatprep.subr.mxu0 0.0
    %96 = vmatpush2.msra.mxu0 0.0
    %97 = vmatprep.subr.mxu0 0.0
    %98 = vmatpush2.msra.mxu0 0.0
    %99 = vmatprep.subr.mxu0 0.0
    %100 = vmatpush2.msra.mxu0 0.0
    %101 = vmatprep.subr.mxu0 0.0
    %102 = vmatpush2.msra.mxu0 0.0
    %103 = vmatprep.subr.mxu0 0.0
    %104 = vmatpush2.msra.mxu0 0.0
    %105 = vmatprep.subr.mxu0 0.0
    %106 = vmatpush2.msra.mxu0 0.0
    %107 = vmatprep.subr.mxu0 0.0
    %108 = vmatpush2.msra.mxu0 0.0
    %109 = vmatprep.subr.mxu0 0.0
    %110 = vmatpush2.msra.mxu0 0.0
    %111 = vmatprep.mubr.f32.mxu0 0.0
    %112 = vmatmul.mubr.f32.gmra.mxu0 %v42
    %v113 = vpop.f32.mrf.mxu0
    %v114 = vadd.f32 %v38, %v113
    %v115 = vpop.f32.mrf.mxu0
    %116 = vmatprep.mubr.f32.mxu0 0.0
    %117 = vmatmul.mubr.f32.gmra.mxu0 %v45
    %v118 = vpop.f32.mrf.mxu0
    %v119 = vadd.f32 %v38, %v118
    %v120 = vpop.f32.mrf.mxu0
    %121 = vdwg.mxu0
    %v122 = vmax.f32 %v114, 0.0
    %v123 = vmax.f32 %v119, 0.0
    %v124 = vld [vmem:[%s3] sm:$0xff]
    %v125 = vld [vmem:[%s3 + $0x8] sm:$0xff]
    %v126 = vld [vmem:[%s3 + $0x10] sm:$0xff]
    %v127 = vld [vmem:[%s3 + $0x18] sm:$0xff]
    %v128 = vld [vmem:[%s3 + $0x20] sm:$0xff]
    %v129 = vld [vmem:[%s3 + $0x28] sm:$0xff]
    %v130 = vld [vmem:[%s3 + $0x30] sm:$0xff]
    %v131 = vld [vmem:[%s3 + $0x38] sm:$0xff]
    %v132 = vld [vmem:[%s4] sm:$0x1]
    %v134 = vlaneseq
    %v135 = vshrl.u32 %v134, 7
    %v136 = vsub.s32 0, %v135
    %v137 = vrot.slane %v132, %v136
    %vm139 = vcmask 523264
    %v141 = vsel %vm139, %v122, 0
    %v144 = vsel %vm139, %v123, 0
    %146 = vmatprep.subr.mxu0 0.0
    %147 = vmatpush1.msra.mxu0 0.0
    %148 = vmatprep.subr.mxu0 0.0
    %149 = vmatpush1.msra.mxu0 0.0
    %150 = vmatprep.subr.mxu0 0.0
    %151 = vmatpush1.msra.mxu0 0.0
    %152 = vmatprep.subr.mxu0 0.0
    %153 = vmatpush1.msra.mxu0 0.0
    %154 = vmatprep.subr.mxu0 0.0
    %155 = vmatpush1.msra.mxu0 0.0
    %156 = vmatprep.subr.mxu0 0.0
    %157 = vmatpush1.msra.mxu0 0.0
    %158 = vmatprep.subr.mxu0 0.0
    %159 = vmatpush1.msra.mxu0 0.0
    %160 = vmatprep.subr.mxu0 0.0
    %161 = vmatpush1.msra.mxu0 0.0
    %162 = vmatprep.subr.mxu0 0.0
    %163 = vmatpush1.msra.mxu0 %v131
    %164 = vmatprep.subr.mxu0 0.0
    %165 = vmatpush1.msra.mxu0 %v130
    %166 = vmatprep.subr.mxu0 0.0
    %167 = vmatpush1.msra.mxu0 %v129
    %168 = vmatprep.subr.mxu0 0.0
    %169 = vmatpush1.msra.mxu0 %v128
    %170 = vmatprep.subr.mxu0 0.0
    %171 = vmatpush1.msra.mxu0 %v127
    %172 = vmatprep.subr.mxu0 0.0
    %173 = vmatpush1.msra.mxu0 %v126
    %174 = vmatprep.subr.mxu0 0.0
    %175 = vmatpush1.msra.mxu0 %v125
    %176 = vmatprep.subr.mxu0 0.0
    %177 = vmatpush1.msra.mxu0 %v124
    %178 = vmatprep.subr.mxu0 0.0
    %179 = vmatpush2.msra.mxu0 0.0
    %180 = vmatprep.subr.mxu0 0.0
    %181 = vmatpush2.msra.mxu0 0.0
    %182 = vmatprep.subr.mxu0 0.0
    %183 = vmatpush2.msra.mxu0 0.0
    %184 = vmatprep.subr.mxu0 0.0
    %185 = vmatpush2.msra.mxu0 0.0
    %186 = vmatprep.subr.mxu0 0.0
    %187 = vmatpush2.msra.mxu0 0.0
    %188 = vmatprep.subr.mxu0 0.0
    %189 = vmatpush2.msra.mxu0 0.0
    %190 = vmatprep.subr.mxu0 0.0
    %191 = vmatpush2.msra.mxu0 0.0
    %192 = vmatprep.subr.mxu0 0.0
    %193 = vmatpush2.msra.mxu0 0.0
    %194 = vmatprep.subr.mxu0 0.0
    %195 = vmatpush2.msra.mxu0 0.0
    %196 = vmatprep.subr.mxu0 0.0
    %197 = vmatpush2.msra.mxu0 0.0
    %198 = vmatprep.subr.mxu0 0.0
    %199 = vmatpush2.msra.mxu0 0.0
    %200 = vmatprep.subr.mxu0 0.0
    %201 = vmatpush2.msra.mxu0 0.0
    %202 = vmatprep.subr.mxu0 0.0
    %203 = vmatpush2.msra.mxu0 0.0
    %204 = vmatprep.subr.mxu0 0.0
    %205 = vmatpush2.msra.mxu0 0.0
    %206 = vmatprep.subr.mxu0 0.0
    %207 = vmatpush2.msra.mxu0 0.0
    %208 = vmatprep.subr.mxu0 0.0
    %209 = vmatpush2.msra.mxu0 0.0
    %210 = vmatprep.mubr.f32.mxu0 0.0
    %211 = vmatmul.mubr.f32.gmra.mxu0 %v141
    %v212 = vpop.f32.mrf.mxu0
    %v213 = vadd.f32 %v137, %v212
    %v214 = vpop.f32.mrf.mxu0
    %215 = vmatprep.mubr.f32.mxu0 0.0
    %216 = vmatmul.mubr.f32.gmra.mxu0 %v144
    %v217 = vpop.f32.mrf.mxu0
    %v218 = vadd.f32 %v137, %v217
    %v219 = vpop.f32.mrf.mxu0
    %220 = vdwg.mxu0
    %v221 = vadd.f32 %v213, %v27
    %v222 = vadd.f32 %v218, %v28
    %v223 = vld [vmem:[%s5] sm:$0x1]
    %v224 = vld [vmem:[%s6] sm:$0x1]
    %v225 = vsel %vm40, %v221, 0.0
    %226 = vadd.xlane.f32.xlu0 %v225
    %v227 = vpop.xlane.xlu0 %226
    %v228 = vsel %vm40, %v222, 0.0
    %229 = vadd.xlane.f32.xlu0 %v228
    %v230 = vpop.xlane.xlu0 %229
    %v231 = vrcp.pop 32.0
    %v232 = vmul.f32 %v227, %v231
    %v233 = vmul.f32 %v230, %v231
    %v234 = vsub.f32 %v221, %v232
    %v235 = vsub.f32 %v222, %v233
    %v236 = vmul.f32 %v234, %v234
    %v237 = vmul.f32 %v235, %v235
    %v238 = vsel %vm40, %v236, 0.0
    %239 = vadd.xlane.f32.xlu0 %v238
    %v240 = vpop.xlane.xlu0 %239
    %v241 = vsel %vm40, %v237, 0.0
    %242 = vadd.xlane.f32.xlu0 %v241
    %v243 = vpop.xlane.xlu0 %242
    %v244 = vmul.f32 %v240, %v231
    %v245 = vmul.f32 %v243, %v231
    %v246 = vadd.f32 %v244, 1e-06
    %v247 = vadd.f32 %v245, 1e-06
    %v248 = vrsqrt.pop %v246
    %v249 = vrsqrt.pop %v247
    %v250 = vmul.f32 %v234, %v248
    %v251 = vmul.f32 %v235, %v249
    %v253 = vlaneseq
    %v254 = vshrl.u32 %v253, 7
    %v255 = vsub.s32 0, %v254
    %v256 = vrot.slane %v223, %v255
    %v258 = vmul.f32 %v250, %v256
    %v259 = vmul.f32 %v251, %v256
    %v261 = vlaneseq
    %v262 = vshrl.u32 %v261, 7
    %v263 = vsub.s32 0, %v262
    %v264 = vrot.slane %v224, %v263
    %v266 = vadd.f32 %v258, %v264
    %v267 = vadd.f32 %v259, %v264
    %268 = vst.msk [vmem:[#allocation2] sm:$0xff] %vm40, %v266
    %269 = vst.msk [vmem:[#allocation2 + $0x8] sm:$0xff] %vm40, %v267
    // Predicated region
    $region30: #{tpu_custom_call.1} parent=1 // pred_check
      _
    $region31: #{tpu_custom_call.1} parent=1 // pred_check_branch
      %271 = sbr.rel (0) target = $region33
    $region32: #{tpu_custom_call.1} parent=1 // pred_region
      %s273 = ssub.s32 256, 256
      %274 = vsyncadd [#allocation3], %s273
      %s275 = sshll.u32 [#allocation2], 4
      %s276 = int_to_ptr.vmem [resolvable:$true] %s275
      %281 = dma.vmem_to_hbm [thread:$0]  %s276, 256, %s7, [#allocation3], 128, 128, 8
    $region33: #{tpu_custom_call.1} parent=1 // pred_fallthru
      _
    // Predicated region
    $region34: #{tpu_custom_call.1} parent=1 // pred_check
      _
    $region35: #{tpu_custom_call.1} parent=1 // pred_check_branch
      %283 = sbr.rel (0) target = $region37
    $region36: #{tpu_custom_call.1} parent=1 // pred_region
      %284 = dma.done [#allocation3], 256
    $region37: #{tpu_custom_call.1} parent=1 // pred_fallthru
      _
    %285 = vsyncpa [#allocation3], 1

</llo_original>
